<compile_context>
chip_gen: v7x
topology: tpu7x:2x2x1
jax: 0.10.0
libtpu: 0.0.40
codegen_flags: <defaults>
</compile_context>

<pallas_src>
from functools import partial

import jax
import jax.numpy as jnp
from jax import lax
from jax.experimental import pallas as pl
from jax.experimental.pallas import tpu as pltpu

EPS = 1e-5
POOL_K, POOL_S, POOL_P = 5, 4, 1


def _convblock_kernel(x_ref, m_ref, w1t_ref, w2t_ref, b1_ref,
                      g1_ref, be1_ref, g2_ref, be2_ref, out_ref, *, wp):
    # x_ref   : (Cin, M)      f32   pooled input, lane-dense (M = N*Hp*Wp)
    # m_ref   : (9, M)        f32   per-tap validity masks (shared by both convs)
    # w1t_ref : (Cout, 9*Cin) f32   conv1 weight, tap-major
    # w2t_ref : (Cout, 9*Cout)f32   conv2 weight, tap-major
    # b1_ref  : (Cout, 1)     f32   conv1 bias
    # g1/be1, g2/be2 : (Cout, 1) f32  BN affine params
    # out_ref : (Cout, M)     f32   lane-dense output slab
    M = x_ref.shape[1]
    inv_m = 1.0 / M
    masks = m_ref[...]                                    # (9, M)

    def taps(v):
        # v: (C, M) -> (9*C, M) im2col slab via static lane-axis shifts + masks.
        # Neighbors that fall outside the Hp x Wp image (or would cross an image
        # boundary after the flat shift) are zeroed by the precomputed masks, so the
        # circular wrap of jnp.roll never leaks into a valid position.
        pieces = []
        for t in range(9):
            dy, dx = divmod(t, 3)
            off = (dy - 1) * wp + (dx - 1)                # flat index offset
            shifted = v if off == 0 else jnp.roll(v, -off, axis=1)
            pieces.append(shifted * masks[t:t + 1, :])
        return jnp.concatenate(pieces, axis=0)

    # ---------------- conv1: roll/mask im2col -> single matmul, lane-dense ----------
    p1 = taps(x_ref[...])                                                # (9*Cin, M)
    x0 = jnp.dot(w1t_ref[...], p1,
                 preferred_element_type=jnp.float32) + b1_ref[...]      # (Cout, M)

    # ---------------- bn1 (batch stats, one sum/sumsq pass) + ReLU ------------------
    mu1 = jnp.sum(x0, axis=1, keepdims=True) * inv_m
    var1 = jnp.maximum(jnp.sum(x0 * x0, axis=1, keepdims=True) * inv_m - mu1 * mu1, 0.0)
    scale1 = g1_ref[...] * lax.rsqrt(var1 + EPS)
    shift1 = be1_ref[...] - mu1 * scale1
    h = jnp.maximum(x0 * scale1 + shift1, 0.0)                           # (Cout, M)

    # ---------------- conv2: same roll/mask taps, single matmul ---------------------
    # conv2 bias is omitted: a per-channel constant cancels exactly in training-mode BN.
    p2 = taps(h)                                                         # (9*Cout, M)
    y = jnp.dot(w2t_ref[...], p2, preferred_element_type=jnp.float32)    # (Cout, M)

    # ---------------- bn2 + ReLU + residual, all lane-dense -------------------------
    mu2 = jnp.sum(y, axis=1, keepdims=True) * inv_m
    var2 = jnp.maximum(jnp.sum(y * y, axis=1, keepdims=True) * inv_m - mu2 * mu2, 0.0)
    scale2 = g2_ref[...] * lax.rsqrt(var2 + EPS)
    shift2 = be2_ref[...] - mu2 * scale2
    out_ref[...] = x0 + jnp.maximum(y * scale2 + shift2, 0.0)


@jax.jit
def convblock_forward(x_nchw, params):
    w1, b1, g1, be1, w2, b2, g2, be2 = params            # w*: HWIO (3,3,I,O)
    del b2   # cancels inside training-mode BatchNorm (see kernel comment)
    N, Cin, H, W = x_nchw.shape
    Cout = w1.shape[-1]
    Hp = (H + 2 * POOL_P - POOL_K) // POOL_S + 1
    Wp = (W + 2 * POOL_P - POOL_K) // POOL_S + 1
    M = N * Hp * Wp

    # Glue: AvgPool (count_include_pad=True) in NCHW, then lane-dense (Cin, M) slab.
    pooled = lax.reduce_window(
        x_nchw.astype(jnp.float32), 0.0, lax.add,
        (1, 1, POOL_K, POOL_K), (1, 1, POOL_S, POOL_S),
        [(0, 0), (0, 0), (POOL_P, POOL_P), (POOL_P, POOL_P)]) * (1.0 / (POOL_K * POOL_K))
    x_cm = jnp.transpose(pooled, (1, 0, 2, 3)).reshape(Cin, M)

    # Per-tap validity masks for the roll-based im2col (same for conv1 and conv2,
    # both being 3x3 / pad 1 over the same Hp x Wp grid).
    yy = (jnp.arange(M, dtype=jnp.int32) % (Hp * Wp)) // Wp
    xx = jnp.arange(M, dtype=jnp.int32) % Wp
    mask_rows = []
    for t in range(9):
        dy, dx = divmod(t, 3)
        ok = ((yy + (dy - 1) >= 0) & (yy + (dy - 1) < Hp) &
              (xx + (dx - 1) >= 0) & (xx + (dx - 1) < Wp))
        mask_rows.append(ok)
    masks = jnp.stack(mask_rows).astype(jnp.float32)      # (9, M)

    # Weights: HWIO -> tap-major (9*C, Cout) -> transposed (Cout, 9*C), f32.
    w1t = jnp.transpose(w1.reshape(9 * Cin, Cout)).astype(jnp.float32)
    w2t = jnp.transpose(w2.reshape(9 * Cout, Cout)).astype(jnp.float32)

    vmem = pl.BlockSpec(memory_space=pltpu.MemorySpace.VMEM)
    out_cm = pl.pallas_call(
        partial(_convblock_kernel, wp=Wp),
        out_shape=jax.ShapeDtypeStruct((Cout, M), jnp.float32),   # lane-dense slab
        in_specs=[vmem] * 9,
        out_specs=vmem,
        # Footprint at these shapes is only a few hundred KiB; 32 MiB scoped VMEM is
        # safe on every generation (v7x's default scoped limit).
        compiler_params=pltpu.CompilerParams(vmem_limit_bytes=32 * 1024 * 1024),
    )(x_cm, masks, w1t, w2t,
      b1.reshape(Cout, 1).astype(jnp.float32),
      g1.reshape(Cout, 1).astype(jnp.float32),
      be1.reshape(Cout, 1).astype(jnp.float32),
      g2.reshape(Cout, 1).astype(jnp.float32),
      be2.reshape(Cout, 1).astype(jnp.float32))

    # (Cout, N*Hp*Wp) -> (N, Cout, Hp, Wp)
    return jnp.transpose(out_cm.reshape(Cout, N, Hp, Wp), (1, 0, 2, 3))


def _reference_forward(x_nchw, params):
    """Pure-JAX reference matching the PyTorch forward (training-mode BN), f32."""
    w1, b1, g1, be1, w2, b2, g2, be2 = params
    x = x_nchw.astype(jnp.float32)
    xs = lax.reduce_window(
        x, 0.0, lax.add, (1, 1, POOL_K, POOL_K), (1, 1, POOL_S, POOL_S),
        [(0, 0), (0, 0), (POOL_P, POOL_P), (POOL_P, POOL_P)]) / (POOL_K * POOL_K)

    def conv(x, w_hwio, b):
        w_oihw = jnp.transpose(w_hwio, (3, 2, 0, 1))
        y = lax.conv_general_dilated(
            x, w_oihw, (1, 1), [(1, 1), (1, 1)],
            dimension_numbers=('NCHW', 'OIHW', 'NCHW'),
            precision=lax.Precision.HIGHEST)
        return y + b[None, :, None, None]

    def bn(x, g, b):
        mu = jnp.mean(x, axis=(0, 2, 3), keepdims=True)
        var = jnp.mean((x - mu) ** 2, axis=(0, 2, 3), keepdims=True)
        return (x - mu) * lax.rsqrt(var + EPS) * g[None, :, None, None] + b[None, :, None, None]

    x0 = conv(xs, w1, b1)
    h = jnp.maximum(bn(x0, g1, be1), 0.0)
    y = conv(h, w2, b2)
    return x0 + jnp.maximum(bn(y, g2, be2), 0.0)


if __name__ == "__main__":
    # Small shapes consistent with the module: N=2, inchs=4, outchs=8, 32x32 spatial
    # (AvgPool2d(5, 4, padding=1) -> 8x8 feature map, i.e. M = 2*8*8 = 128, one full
    # lane vreg width for the lane-dense slab).
    N, Cin, Cout, H, W = 2, 4, 8, 32, 32
    ks = jax.random.split(jax.random.PRNGKey(0), 9)
    x = jax.random.normal(ks[0], (N, Cin, H, W), jnp.float32)
    w1 = 0.2 * jax.random.normal(ks[1], (3, 3, Cin, Cout), jnp.float32)    # HWIO
    b1 = 0.1 * jax.random.normal(ks[2], (Cout,), jnp.float32)
    g1 = 1.0 + 0.1 * jax.random.normal(ks[3], (Cout,), jnp.float32)
    be1 = 0.1 * jax.random.normal(ks[4], (Cout,), jnp.float32)
    w2 = 0.2 * jax.random.normal(ks[5], (3, 3, Cout, Cout), jnp.float32)   # HWIO
    b2 = 0.1 * jax.random.normal(ks[6], (Cout,), jnp.float32)
    g2 = 1.0 + 0.1 * jax.random.normal(ks[7], (Cout,), jnp.float32)
    be2 = 0.1 * jax.random.normal(ks[8], (Cout,), jnp.float32)
    params = (w1, b1, g1, be1, w2, b2, g2, be2)

    out = jax.block_until_ready(convblock_forward(x, params))
    assert out.shape == (N, Cout, 8, 8), out.shape

    ref = _reference_forward(x, params)
    err = float(jnp.max(jnp.abs(out - ref)))
    assert jnp.allclose(out, ref, rtol=5e-4, atol=5e-4), err

    print("KERNEL_OK")
</pallas_src>

<mosaic_0001>
module attributes {stable_mosaic.version = 11 : i64} {
  func.func @_convblock_kernel(%arg0: memref<4x128xf32, #tpu.memory_space<vmem>>, %arg1: memref<9x128xf32, #tpu.memory_space<vmem>>, %arg2: memref<8x36xf32, #tpu.memory_space<vmem>>, %arg3: memref<8x72xf32, #tpu.memory_space<vmem>>, %arg4: memref<8x1xf32, #tpu.memory_space<vmem>>, %arg5: memref<8x1xf32, #tpu.memory_space<vmem>>, %arg6: memref<8x1xf32, #tpu.memory_space<vmem>>, %arg7: memref<8x1xf32, #tpu.memory_space<vmem>>, %arg8: memref<8x1xf32, #tpu.memory_space<vmem>>, %arg9: memref<8x128xf32, #tpu.memory_space<vmem>>) attributes {dimension_semantics = [], scalar_prefetch = 0 : i64, scratch_operands = 0 : i64, tpu.core_type = #tpu.core_type<tc>} {
    %c0 = arith.constant 0 : index
    %c0_0 = arith.constant 0 : index
    %0 = vector.load %arg1[%c0, %c0_0] : memref<9x128xf32, #tpu.memory_space<vmem>>, vector<9x128xf32>
    %c0_1 = arith.constant 0 : index
    %c0_2 = arith.constant 0 : index
    %1 = vector.load %arg0[%c0_1, %c0_2] : memref<4x128xf32, #tpu.memory_space<vmem>>, vector<4x128xf32>
    %2 = vector.extract_strided_slice %1 {offsets = [0, 119], sizes = [4, 9], strides = [1, 1]} : vector<4x128xf32> to vector<4x9xf32>
    %3 = vector.extract_strided_slice %1 {offsets = [0, 0], sizes = [4, 119], strides = [1, 1]} : vector<4x128xf32> to vector<4x119xf32>
    %4 = tpu.concatenate %2, %3 in 1 : vector<4x9xf32>, vector<4x119xf32> -> vector<4x128xf32>
    %5 = vector.extract_strided_slice %0 {offsets = [0, 0], sizes = [1, 128], strides = [1, 1]} : vector<9x128xf32> to vector<1x128xf32>
    %6 = vector.broadcast %5 : vector<1x128xf32> to vector<4x128xf32>
    %7 = arith.mulf %4, %6 : vector<4x128xf32>
    %8 = vector.extract_strided_slice %1 {offsets = [0, 120], sizes = [4, 8], strides = [1, 1]} : vector<4x128xf32> to vector<4x8xf32>
    %9 = vector.extract_strided_slice %1 {offsets = [0, 0], sizes = [4, 120], strides = [1, 1]} : vector<4x128xf32> to vector<4x120xf32>
    %10 = tpu.concatenate %8, %9 in 1 : vector<4x8xf32>, vector<4x120xf32> -> vector<4x128xf32>
    %11 = vector.extract_strided_slice %0 {offsets = [1, 0], sizes = [1, 128], strides = [1, 1]} : vector<9x128xf32> to vector<1x128xf32>
    %12 = vector.broadcast %11 : vector<1x128xf32> to vector<4x128xf32>
    %13 = arith.mulf %10, %12 : vector<4x128xf32>
    %14 = vector.extract_strided_slice %1 {offsets = [0, 121], sizes = [4, 7], strides = [1, 1]} : vector<4x128xf32> to vector<4x7xf32>
    %15 = vector.extract_strided_slice %1 {offsets = [0, 0], sizes = [4, 121], strides = [1, 1]} : vector<4x128xf32> to vector<4x121xf32>
    %16 = tpu.concatenate %14, %15 in 1 : vector<4x7xf32>, vector<4x121xf32> -> vector<4x128xf32>
    %17 = vector.extract_strided_slice %0 {offsets = [2, 0], sizes = [1, 128], strides = [1, 1]} : vector<9x128xf32> to vector<1x128xf32>
    %18 = vector.broadcast %17 : vector<1x128xf32> to vector<4x128xf32>
    %19 = arith.mulf %16, %18 : vector<4x128xf32>
    %20 = vector.extract_strided_slice %1 {offsets = [0, 127], sizes = [4, 1], strides = [1, 1]} : vector<4x128xf32> to vector<4x1xf32>
    %21 = vector.extract_strided_slice %1 {offsets = [0, 0], sizes = [4, 127], strides = [1, 1]} : vector<4x128xf32> to vector<4x127xf32>
    %22 = tpu.concatenate %20, %21 in 1 : vector<4x1xf32>, vector<4x127xf32> -> vector<4x128xf32>
    %23 = vector.extract_strided_slice %0 {offsets = [3, 0], sizes = [1, 128], strides = [1, 1]} : vector<9x128xf32> to vector<1x128xf32>
    %24 = vector.broadcast %23 : vector<1x128xf32> to vector<4x128xf32>
    %25 = arith.mulf %22, %24 : vector<4x128xf32>
    %26 = vector.extract_strided_slice %0 {offsets = [4, 0], sizes = [1, 128], strides = [1, 1]} : vector<9x128xf32> to vector<1x128xf32>
    %27 = vector.broadcast %26 : vector<1x128xf32> to vector<4x128xf32>
    %28 = arith.mulf %1, %27 : vector<4x128xf32>
    %29 = vector.extract_strided_slice %1 {offsets = [0, 1], sizes = [4, 127], strides = [1, 1]} : vector<4x128xf32> to vector<4x127xf32>
    %30 = vector.extract_strided_slice %1 {offsets = [0, 0], sizes = [4, 1], strides = [1, 1]} : vector<4x128xf32> to vector<4x1xf32>
    %31 = tpu.concatenate %29, %30 in 1 : vector<4x127xf32>, vector<4x1xf32> -> vector<4x128xf32>
    %32 = vector.extract_strided_slice %0 {offsets = [5, 0], sizes = [1, 128], strides = [1, 1]} : vector<9x128xf32> to vector<1x128xf32>
    %33 = vector.broadcast %32 : vector<1x128xf32> to vector<4x128xf32>
    %34 = arith.mulf %31, %33 : vector<4x128xf32>
    %35 = vector.extract_strided_slice %1 {offsets = [0, 7], sizes = [4, 121], strides = [1, 1]} : vector<4x128xf32> to vector<4x121xf32>
    %36 = vector.extract_strided_slice %1 {offsets = [0, 0], sizes = [4, 7], strides = [1, 1]} : vector<4x128xf32> to vector<4x7xf32>
    %37 = tpu.concatenate %35, %36 in 1 : vector<4x121xf32>, vector<4x7xf32> -> vector<4x128xf32>
    %38 = vector.extract_strided_slice %0 {offsets = [6, 0], sizes = [1, 128], strides = [1, 1]} : vector<9x128xf32> to vector<1x128xf32>
    %39 = vector.broadcast %38 : vector<1x128xf32> to vector<4x128xf32>
    %40 = arith.mulf %37, %39 : vector<4x128xf32>
    %41 = vector.extract_strided_slice %1 {offsets = [0, 8], sizes = [4, 120], strides = [1, 1]} : vector<4x128xf32> to vector<4x120xf32>
    %42 = vector.extract_strided_slice %1 {offsets = [0, 0], sizes = [4, 8], strides = [1, 1]} : vector<4x128xf32> to vector<4x8xf32>
    %43 = tpu.concatenate %41, %42 in 1 : vector<4x120xf32>, vector<4x8xf32> -> vector<4x128xf32>
    %44 = vector.extract_strided_slice %0 {offsets = [7, 0], sizes = [1, 128], strides = [1, 1]} : vector<9x128xf32> to vector<1x128xf32>
    %45 = vector.broadcast %44 : vector<1x128xf32> to vector<4x128xf32>
    %46 = arith.mulf %43, %45 : vector<4x128xf32>
    %47 = vector.extract_strided_slice %1 {offsets = [0, 9], sizes = [4, 119], strides = [1, 1]} : vector<4x128xf32> to vector<4x119xf32>
    %48 = vector.extract_strided_slice %1 {offsets = [0, 0], sizes = [4, 9], strides = [1, 1]} : vector<4x128xf32> to vector<4x9xf32>
    %49 = tpu.concatenate %47, %48 in 1 : vector<4x119xf32>, vector<4x9xf32> -> vector<4x128xf32>
    %50 = vector.extract_strided_slice %0 {offsets = [8, 0], sizes = [1, 128], strides = [1, 1]} : vector<9x128xf32> to vector<1x128xf32>
    %51 = vector.broadcast %50 : vector<1x128xf32> to vector<4x128xf32>
    %52 = arith.mulf %49, %51 : vector<4x128xf32>
    %53 = tpu.concatenate %7, %13, %19, %25, %28, %34, %40, %46, %52 in 0 : vector<4x128xf32>, vector<4x128xf32>, vector<4x128xf32>, vector<4x128xf32>, vector<4x128xf32>, vector<4x128xf32>, vector<4x128xf32>, vector<4x128xf32>, vector<4x128xf32> -> vector<36x128xf32>
    %c0_3 = arith.constant 0 : index
    %c0_4 = arith.constant 0 : index
    %54 = vector.load %arg2[%c0_3, %c0_4] : memref<8x36xf32, #tpu.memory_space<vmem>>, vector<8x36xf32>
    %cst = arith.constant dense<0.000000e+00> : vector<8x128xf32>
    %55 = tpu.matmul %54, %53, %cst {dimension_numbers = #tpu.dot_dimension_numbers<[1], [0], [0], [1], [0, 0, 1, 1], [], []>} : vector<8x36xf32>, vector<36x128xf32>, vector<8x128xf32> -> vector<8x128xf32>
    %c0_5 = arith.constant 0 : index
    %c0_6 = arith.constant 0 : index
    %56 = vector.load %arg4[%c0_5, %c0_6] : memref<8x1xf32, #tpu.memory_space<vmem>>, vector<8x1xf32>
    %57 = vector.broadcast %56 : vector<8x1xf32> to vector<8x128xf32>
    %58 = arith.addf %55, %57 : vector<8x128xf32>
    %cst_7 = arith.constant dense<0.000000e+00> : vector<8xf32>
    %59 = vector.multi_reduction <add>, %58, %cst_7 [1] : vector<8x128xf32> to vector<8xf32>
    %60 = vector.shape_cast %59 : vector<8xf32> to vector<8x1xf32>
    %cst_8 = arith.constant 7.812500e-03 : f32
    %61 = vector.broadcast %cst_8 : f32 to vector<8x1xf32>
    %62 = arith.mulf %60, %61 : vector<8x1xf32>
    %63 = arith.mulf %58, %58 : vector<8x128xf32>
    %cst_9 = arith.constant dense<0.000000e+00> : vector<8xf32>
    %64 = vector.multi_reduction <add>, %63, %cst_9 [1] : vector<8x128xf32> to vector<8xf32>
    %65 = vector.shape_cast %64 : vector<8xf32> to vector<8x1xf32>
    %cst_10 = arith.constant 7.812500e-03 : f32
    %66 = vector.broadcast %cst_10 : f32 to vector<8x1xf32>
    %67 = arith.mulf %65, %66 : vector<8x1xf32>
    %68 = arith.mulf %62, %62 : vector<8x1xf32>
    %69 = arith.subf %67, %68 : vector<8x1xf32>
    %cst_11 = arith.constant 0.000000e+00 : f32
    %70 = vector.broadcast %cst_11 : f32 to vector<8x1xf32>
    %71 = arith.maximumf %69, %70 : vector<8x1xf32>
    %c0_12 = arith.constant 0 : index
    %c0_13 = arith.constant 0 : index
    %72 = vector.load %arg5[%c0_12, %c0_13] : memref<8x1xf32, #tpu.memory_space<vmem>>, vector<8x1xf32>
    %cst_14 = arith.constant 9.99999974E-6 : f32
    %73 = vector.broadcast %cst_14 : f32 to vector<8x1xf32>
    %74 = arith.addf %71, %73 : vector<8x1xf32>
    %75 = math.rsqrt %74 : vector<8x1xf32>
    %76 = arith.mulf %72, %75 : vector<8x1xf32>
    %c0_15 = arith.constant 0 : index
    %c0_16 = arith.constant 0 : index
    %77 = vector.load %arg6[%c0_15, %c0_16] : memref<8x1xf32, #tpu.memory_space<vmem>>, vector<8x1xf32>
    %78 = arith.mulf %62, %76 : vector<8x1xf32>
    %79 = arith.subf %77, %78 : vector<8x1xf32>
    %80 = vector.broadcast %76 : vector<8x1xf32> to vector<8x128xf32>
    %81 = arith.mulf %58, %80 : vector<8x128xf32>
    %82 = vector.broadcast %79 : vector<8x1xf32> to vector<8x128xf32>
    %83 = arith.addf %81, %82 : vector<8x128xf32>
    %cst_17 = arith.constant 0.000000e+00 : f32
    %84 = vector.broadcast %cst_17 : f32 to vector<8x128xf32>
    %85 = arith.maximumf %83, %84 : vector<8x128xf32>
    %86 = vector.extract_strided_slice %85 {offsets = [0, 119], sizes = [8, 9], strides = [1, 1]} : vector<8x128xf32> to vector<8x9xf32>
    %87 = vector.extract_strided_slice %85 {offsets = [0, 0], sizes = [8, 119], strides = [1, 1]} : vector<8x128xf32> to vector<8x119xf32>
    %88 = tpu.concatenate %86, %87 in 1 : vector<8x9xf32>, vector<8x119xf32> -> vector<8x128xf32>
    %89 = vector.extract_strided_slice %0 {offsets = [0, 0], sizes = [1, 128], strides = [1, 1]} : vector<9x128xf32> to vector<1x128xf32>
    %90 = vector.broadcast %89 : vector<1x128xf32> to vector<8x128xf32>
    %91 = arith.mulf %88, %90 : vector<8x128xf32>
    %92 = vector.extract_strided_slice %85 {offsets = [0, 120], sizes = [8, 8], strides = [1, 1]} : vector<8x128xf32> to vector<8x8xf32>
    %93 = vector.extract_strided_slice %85 {offsets = [0, 0], sizes = [8, 120], strides = [1, 1]} : vector<8x128xf32> to vector<8x120xf32>
    %94 = tpu.concatenate %92, %93 in 1 : vector<8x8xf32>, vector<8x120xf32> -> vector<8x128xf32>
    %95 = vector.extract_strided_slice %0 {offsets = [1, 0], sizes = [1, 128], strides = [1, 1]} : vector<9x128xf32> to vector<1x128xf32>
    %96 = vector.broadcast %95 : vector<1x128xf32> to vector<8x128xf32>
    %97 = arith.mulf %94, %96 : vector<8x128xf32>
    %98 = vector.extract_strided_slice %85 {offsets = [0, 121], sizes = [8, 7], strides = [1, 1]} : vector<8x128xf32> to vector<8x7xf32>
    %99 = vector.extract_strided_slice %85 {offsets = [0, 0], sizes = [8, 121], strides = [1, 1]} : vector<8x128xf32> to vector<8x121xf32>
    %100 = tpu.concatenate %98, %99 in 1 : vector<8x7xf32>, vector<8x121xf32> -> vector<8x128xf32>
    %101 = vector.extract_strided_slice %0 {offsets = [2, 0], sizes = [1, 128], strides = [1, 1]} : vector<9x128xf32> to vector<1x128xf32>
    %102 = vector.broadcast %101 : vector<1x128xf32> to vector<8x128xf32>
    %103 = arith.mulf %100, %102 : vector<8x128xf32>
    %104 = vector.extract_strided_slice %85 {offsets = [0, 127], sizes = [8, 1], strides = [1, 1]} : vector<8x128xf32> to vector<8x1xf32>
    %105 = vector.extract_strided_slice %85 {offsets = [0, 0], sizes = [8, 127], strides = [1, 1]} : vector<8x128xf32> to vector<8x127xf32>
    %106 = tpu.concatenate %104, %105 in 1 : vector<8x1xf32>, vector<8x127xf32> -> vector<8x128xf32>
    %107 = vector.extract_strided_slice %0 {offsets = [3, 0], sizes = [1, 128], strides = [1, 1]} : vector<9x128xf32> to vector<1x128xf32>
    %108 = vector.broadcast %107 : vector<1x128xf32> to vector<8x128xf32>
    %109 = arith.mulf %106, %108 : vector<8x128xf32>
    %110 = vector.extract_strided_slice %0 {offsets = [4, 0], sizes = [1, 128], strides = [1, 1]} : vector<9x128xf32> to vector<1x128xf32>
    %111 = vector.broadcast %110 : vector<1x128xf32> to vector<8x128xf32>
    %112 = arith.mulf %85, %111 : vector<8x128xf32>
    %113 = vector.extract_strided_slice %85 {offsets = [0, 1], sizes = [8, 127], strides = [1, 1]} : vector<8x128xf32> to vector<8x127xf32>
    %114 = vector.extract_strided_slice %85 {offsets = [0, 0], sizes = [8, 1], strides = [1, 1]} : vector<8x128xf32> to vector<8x1xf32>
    %115 = tpu.concatenate %113, %114 in 1 : vector<8x127xf32>, vector<8x1xf32> -> vector<8x128xf32>
    %116 = vector.extract_strided_slice %0 {offsets = [5, 0], sizes = [1, 128], strides = [1, 1]} : vector<9x128xf32> to vector<1x128xf32>
    %117 = vector.broadcast %116 : vector<1x128xf32> to vector<8x128xf32>
    %118 = arith.mulf %115, %117 : vector<8x128xf32>
    %119 = vector.extract_strided_slice %85 {offsets = [0, 7], sizes = [8, 121], strides = [1, 1]} : vector<8x128xf32> to vector<8x121xf32>
    %120 = vector.extract_strided_slice %85 {offsets = [0, 0], sizes = [8, 7], strides = [1, 1]} : vector<8x128xf32> to vector<8x7xf32>
    %121 = tpu.concatenate %119, %120 in 1 : vector<8x121xf32>, vector<8x7xf32> -> vector<8x128xf32>
    %122 = vector.extract_strided_slice %0 {offsets = [6, 0], sizes = [1, 128], strides = [1, 1]} : vector<9x128xf32> to vector<1x128xf32>
    %123 = vector.broadcast %122 : vector<1x128xf32> to vector<8x128xf32>
    %124 = arith.mulf %121, %123 : vector<8x128xf32>
    %125 = vector.extract_strided_slice %85 {offsets = [0, 8], sizes = [8, 120], strides = [1, 1]} : vector<8x128xf32> to vector<8x120xf32>
    %126 = vector.extract_strided_slice %85 {offsets = [0, 0], sizes = [8, 8], strides = [1, 1]} : vector<8x128xf32> to vector<8x8xf32>
    %127 = tpu.concatenate %125, %126 in 1 : vector<8x120xf32>, vector<8x8xf32> -> vector<8x128xf32>
    %128 = vector.extract_strided_slice %0 {offsets = [7, 0], sizes = [1, 128], strides = [1, 1]} : vector<9x128xf32> to vector<1x128xf32>
    %129 = vector.broadcast %128 : vector<1x128xf32> to vector<8x128xf32>
    %130 = arith.mulf %127, %129 : vector<8x128xf32>
    %131 = vector.extract_strided_slice %85 {offsets = [0, 9], sizes = [8, 119], strides = [1, 1]} : vector<8x128xf32> to vector<8x119xf32>
    %132 = vector.extract_strided_slice %85 {offsets = [0, 0], sizes = [8, 9], strides = [1, 1]} : vector<8x128xf32> to vector<8x9xf32>
    %133 = tpu.concatenate %131, %132 in 1 : vector<8x119xf32>, vector<8x9xf32> -> vector<8x128xf32>
    %134 = vector.extract_strided_slice %0 {offsets = [8, 0], sizes = [1, 128], strides = [1, 1]} : vector<9x128xf32> to vector<1x128xf32>
    %135 = vector.broadcast %134 : vector<1x128xf32> to vector<8x128xf32>
    %136 = arith.mulf %133, %135 : vector<8x128xf32>
    %137 = tpu.concatenate %91, %97, %103, %109, %112, %118, %124, %130, %136 in 0 : vector<8x128xf32>, vector<8x128xf32>, vector<8x128xf32>, vector<8x128xf32>, vector<8x128xf32>, vector<8x128xf32>, vector<8x128xf32>, vector<8x128xf32>, vector<8x128xf32> -> vector<72x128xf32>
    %c0_18 = arith.constant 0 : index
    %c0_19 = arith.constant 0 : index
    %138 = vector.load %arg3[%c0_18, %c0_19] : memref<8x72xf32, #tpu.memory_space<vmem>>, vector<8x72xf32>
    %cst_20 = arith.constant dense<0.000000e+00> : vector<8x128xf32>
    %139 = tpu.matmul %138, %137, %cst_20 {dimension_numbers = #tpu.dot_dimension_numbers<[1], [0], [0], [1], [0, 0, 1, 1], [], []>} : vector<8x72xf32>, vector<72x128xf32>, vector<8x128xf32> -> vector<8x128xf32>
    %cst_21 = arith.constant dense<0.000000e+00> : vector<8xf32>
    %140 = vector.multi_reduction <add>, %139, %cst_21 [1] : vector<8x128xf32> to vector<8xf32>
    %141 = vector.shape_cast %140 : vector<8xf32> to vector<8x1xf32>
    %cst_22 = arith.constant 7.812500e-03 : f32
    %142 = vector.broadcast %cst_22 : f32 to vector<8x1xf32>
    %143 = arith.mulf %141, %142 : vector<8x1xf32>
    %144 = arith.mulf %139, %139 : vector<8x128xf32>
    %cst_23 = arith.constant dense<0.000000e+00> : vector<8xf32>
    %145 = vector.multi_reduction <add>, %144, %cst_23 [1] : vector<8x128xf32> to vector<8xf32>
    %146 = vector.shape_cast %145 : vector<8xf32> to vector<8x1xf32>
    %cst_24 = arith.constant 7.812500e-03 : f32
    %147 = vector.broadcast %cst_24 : f32 to vector<8x1xf32>
    %148 = arith.mulf %146, %147 : vector<8x1xf32>
    %149 = arith.mulf %143, %143 : vector<8x1xf32>
    %150 = arith.subf %148, %149 : vector<8x1xf32>
    %cst_25 = arith.constant 0.000000e+00 : f32
    %151 = vector.broadcast %cst_25 : f32 to vector<8x1xf32>
    %152 = arith.maximumf %150, %151 : vector<8x1xf32>
    %c0_26 = arith.constant 0 : index
    %c0_27 = arith.constant 0 : index
    %153 = vector.load %arg7[%c0_26, %c0_27] : memref<8x1xf32, #tpu.memory_space<vmem>>, vector<8x1xf32>
    %cst_28 = arith.constant 9.99999974E-6 : f32
    %154 = vector.broadcast %cst_28 : f32 to vector<8x1xf32>
    %155 = arith.addf %152, %154 : vector<8x1xf32>
    %156 = math.rsqrt %155 : vector<8x1xf32>
    %157 = arith.mulf %153, %156 : vector<8x1xf32>
    %c0_29 = arith.constant 0 : index
    %c0_30 = arith.constant 0 : index
    %158 = vector.load %arg8[%c0_29, %c0_30] : memref<8x1xf32, #tpu.memory_space<vmem>>, vector<8x1xf32>
    %159 = arith.mulf %143, %157 : vector<8x1xf32>
    %160 = arith.subf %158, %159 : vector<8x1xf32>
    %161 = vector.broadcast %157 : vector<8x1xf32> to vector<8x128xf32>
    %162 = arith.mulf %139, %161 : vector<8x128xf32>
    %163 = vector.broadcast %160 : vector<8x1xf32> to vector<8x128xf32>
    %164 = arith.addf %162, %163 : vector<8x128xf32>
    %cst_31 = arith.constant 0.000000e+00 : f32
    %165 = vector.broadcast %cst_31 : f32 to vector<8x128xf32>
    %166 = arith.maximumf %164, %165 : vector<8x128xf32>
    %167 = arith.addf %58, %166 : vector<8x128xf32>
    %c0_32 = arith.constant 0 : index
    %c0_33 = arith.constant 0 : index
    %168 = vector.load %arg9[%c0_32, %c0_33] : memref<8x128xf32, #tpu.memory_space<vmem>>, vector<8x128xf32>
    tpu.vector_store %arg9[%c0_32, %c0_33], %167 {strides = array<i32>} : memref<8x128xf32, #tpu.memory_space<vmem>>, vector<8x128xf32>,
    return
  }
}

</mosaic_0001>

<llo_original>
// kernel: convblock_forward.1
$region0: #{convblock_forward.1}
  #allocation0 [shape = 'u32[]', space=smem, size = 0x4, offset = 0x4, fixed_abs, tag = 'smem constant byte address 0x4 - core index']
  #allocation1 [shape = 'u32[144,128]{1,0:T(1,128)}', space=vmem, size = 0x12000, scoped, tag = 'internal scratch']
  %s0 = inlined_call_operand.vmem [shape: f32[4,128], index: 0, kind: input, shape index: {}]
  %s1 = inlined_call_operand.vmem [shape: f32[9,128], index: 1, kind: input, shape index: {}]
  %s2 = inlined_call_operand.vmem [shape: f32[8,36], index: 2, kind: input, shape index: {}]
  %s3 = inlined_call_operand.vmem [shape: f32[8,72], index: 3, kind: input, shape index: {}]
  %s4 = inlined_call_operand.vmem [shape: f32[8,1], index: 4, kind: input, shape index: {}]
  %s5 = inlined_call_operand.vmem [shape: f32[8,1], index: 5, kind: input, shape index: {}]
  %s6 = inlined_call_operand.vmem [shape: f32[8,1], index: 6, kind: input, shape index: {}]
  %s7 = inlined_call_operand.vmem [shape: f32[8,1], index: 7, kind: input, shape index: {}]
  %s8 = inlined_call_operand.vmem [shape: f32[8,1], index: 8, kind: input, shape index: {}]
  %s9 = inlined_call_operand.vmem [shape: f32[8,128], index: 9, kind: output, shape index: {}]
  %s10 = sld [smem:[#allocation0]]
  $region46: #{convblock_forward.1} parent=0
    _
  %s12 = ssub.s32 1, %s10
  %s13 = scalar_select 0, %s12, %s10
  // Predicated region
  $region2: #{convblock_forward.1} parent=0 // pred_check
    _
  $region3: #{convblock_forward.1} parent=0 // pred_check_branch
    %15 = sbr.rel (0) target = $region5
  $region4: #{convblock_forward.1} parent=0 // pred_region
    _
  $region5: #{convblock_forward.1} parent=0 // pred_fallthru
    _
  // Predicated region
  $region6: #{convblock_forward.1} parent=0 // pred_check
    _
  $region7: #{convblock_forward.1} parent=0 // pred_check_branch
    %17 = sbr.rel (0) target = $region9
  $region8: #{convblock_forward.1} parent=0 // pred_region
    _
  $region9: #{convblock_forward.1} parent=0 // pred_fallthru
    _
  // Predicated region
  $region10: #{convblock_forward.1} parent=0 // pred_check
    _
  $region11: #{convblock_forward.1} parent=0 // pred_check_branch
    %19 = sbr.rel (0) target = $region13
  $region12: #{convblock_forward.1} parent=0 // pred_region
    _
  $region13: #{convblock_forward.1} parent=0 // pred_fallthru
    _
  // Predicated region
  $region14: #{convblock_forward.1} parent=0 // pred_check
    _
  $region15: #{convblock_forward.1} parent=0 // pred_check_branch
    %21 = sbr.rel (0) target = $region17
  $region16: #{convblock_forward.1} parent=0 // pred_region
    _
  $region17: #{convblock_forward.1} parent=0 // pred_fallthru
    _
  // Predicated region
  $region18: #{convblock_forward.1} parent=0 // pred_check
    _
  $region19: #{convblock_forward.1} parent=0 // pred_check_branch
    %23 = sbr.rel (0) target = $region21
  $region20: #{convblock_forward.1} parent=0 // pred_region
    _
  $region21: #{convblock_forward.1} parent=0 // pred_fallthru
    _
  // Predicated region
  $region22: #{convblock_forward.1} parent=0 // pred_check
    _
  $region23: #{convblock_forward.1} parent=0 // pred_check_branch
    %25 = sbr.rel (0) target = $region25
  $region24: #{convblock_forward.1} parent=0 // pred_region
    _
  $region25: #{convblock_forward.1} parent=0 // pred_fallthru
    _
  // Predicated region
  $region26: #{convblock_forward.1} parent=0 // pred_check
    _
  $region27: #{convblock_forward.1} parent=0 // pred_check_branch
    %27 = sbr.rel (0) target = $region29
  $region28: #{convblock_forward.1} parent=0 // pred_region
    _
  $region29: #{convblock_forward.1} parent=0 // pred_fallthru
    _
  // Predicated region
  $region30: #{convblock_forward.1} parent=0 // pred_check
    _
  $region31: #{convblock_forward.1} parent=0 // pred_check_branch
    %29 = sbr.rel (0) target = $region33
  $region32: #{convblock_forward.1} parent=0 // pred_region
    _
  $region33: #{convblock_forward.1} parent=0 // pred_fallthru
    _
  // Predicated region
  $region34: #{convblock_forward.1} parent=0 // pred_check
    _
  $region35: #{convblock_forward.1} parent=0 // pred_check_branch
    %31 = sbr.rel (0) target = $region37
  $region36: #{convblock_forward.1} parent=0 // pred_region
    _
  $region37: #{convblock_forward.1} parent=0 // pred_fallthru
    _
  %v32 = vld [vmem:[%s1] sm:$0xff]
  %v33 = vld [vmem:[%s1 + $0x8] sm:$0x1]
  %v34 = vld [vmem:[%s0] sm:$0xf]
  %36 = vrot.lane.b32.xlu0 %v34, 9
  %v37 = vpop.permute.xlu0 %36
  %v39 = vlaneseq
  %v40 = vshrl.u32 %v39, 7
  %v41 = vsub.s32 0, %v40
  %v42 = vrot.slane %v32, %v41
  %v43 = vmul.f32 %v37, %v42
  %44 = vrot.lane.b32.xlu0 %v34, 8
  %v45 = vpop.permute.xlu0 %44
  %v47 = vlaneseq
  %v48 = vshrl.u32 %v47, 7
  %v49 = vsub.s32 1, %v48
  %v50 = vrot.slane %v32, %v49
  %v51 = vmul.f32 %v45, %v50
  %52 = vrot.lane.b32.xlu0 %v34, 7
  %v53 = vpop.permute.xlu0 %52
  %v55 = vlaneseq
  %v56 = vshrl.u32 %v55, 7
  %v57 = vsub.s32 2, %v56
  %v58 = vrot.slane %v32, %v57
  %v59 = vmul.f32 %v53, %v58
  %60 = vrot.lane.b32.xlu0 %v34, 1
  %v61 = vpop.permute.xlu0 %60
  %v63 = vlaneseq
  %v64 = vshrl.u32 %v63, 7
  %v65 = vsub.s32 3, %v64
  %v66 = vrot.slane %v32, %v65
  %v67 = vmul.f32 %v61, %v66
  %v68 = vlaneseq
  %v69 = vshrl.u32 %v68, 7
  %v70 = vsub.s32 4, %v69
  %v71 = vrot.slane %v32, %v70
  %v72 = vmul.f32 %v34, %v71
  %73 = vrot.lane.b32.xlu0 %v34, 127
  %v74 = vpop.permute.xlu0 %73
  %v76 = vlaneseq
  %v77 = vshrl.u32 %v76, 7
  %v78 = vsub.s32 5, %v77
  %v79 = vrot.slane %v32, %v78
  %v80 = vmul.f32 %v74, %v79
  %81 = vrot.lane.b32.xlu0 %v34, 121
  %v82 = vpop.permute.xlu0 %81
  %v84 = vlaneseq
  %v85 = vshrl.u32 %v84, 7
  %v86 = vsub.s32 6, %v85
  %v87 = vrot.slane %v32, %v86
  %v88 = vmul.f32 %v82, %v87
  %89 = vrot.lane.b32.xlu0 %v34, 120
  %v90 = vpop.permute.xlu0 %89
  %v92 = vlaneseq
  %v93 = vshrl.u32 %v92, 7
  %v94 = vsub.s32 7, %v93
  %v95 = vrot.slane %v32, %v94
  %v96 = vmul.f32 %v90, %v95
  %97 = vrot.lane.b32.xlu0 %v34, 119
  %v98 = vpop.permute.xlu0 %97
  %v100 = vlaneseq
  %v101 = vshrl.u32 %v100, 7
  %v102 = vsub.s32 0, %v101
  %v103 = vrot.slane %v33, %v102
  %v104 = vmul.f32 %v98, %v103
  %v106 = vrot.slane %v51, 4
  %v109 = vrot.slane %v67, 4
  %v112 = vrot.slane %v80, 4
  %v115 = vrot.slane %v96, 4
  %vm117 = vcmask 1043456
  %v118 = vsel %vm117, %v43, %v106
  %v119 = vsel %vm117, %v59, %v109
  %v120 = vsel %vm117, %v72, %v112
  %v121 = vsel %vm117, %v88, %v115
  %v122 = vld [vmem:[%s2] sm:$0xff]
  %v123 = vld [vmem:[%s4] sm:$0xff]
  %125 = vset.pattern.permute.xlu0 0
  %126 = vperm.xlu0 %125, %v123
  %v127 = vpop.permute.xlu0 %126
  %vm129 = vcmask 293888
  %v131 = vsel %vm129, %v122, 0
  %v134 = vsel %vm117, %v104, 0
  %136 = vmatprep.subr.mxu0 0.0
  %137 = vmatpush1.msra.mxu0 %v118
  %138 = vmatprep.subr.mxu0 0.0
  %139 = vmatpush1.msra.mxu0 %v119
  %140 = vmatprep.subr.mxu0 0.0
  %141 = vmatpush1.msra.mxu0 %v120
  %142 = vmatprep.subr.mxu0 0.0
  %143 = vmatpush1.msra.mxu0 %v121
  %144 = vmatprep.subr.mxu0 0.0
  %145 = vmatpush1.msra.mxu0 %v134
  %146 = vmatprep.subr.mxu0 0.0
  %147 = vmatpush1.msra.mxu0 0.0
  %148 = vmatprep.subr.mxu0 0.0
  %149 = vmatpush1.msra.mxu0 0.0
  %150 = vmatprep.subr.mxu0 0.0
  %151 = vmatpush1.msra.mxu0 0.0
  %152 = vmatprep.subr.mxu0 0.0
  %153 = vmatpush1.msra.mxu0 0.0
  %154 = vmatprep.subr.mxu0 0.0
  %155 = vmatpush1.msra.mxu0 0.0
  %156 = vmatprep.subr.mxu0 0.0
  %157 = vmatpush1.msra.mxu0 0.0
  %158 = vmatprep.subr.mxu0 0.0
  %159 = vmatpush1.msra.mxu0 0.0
  %160 = vmatprep.subr.mxu0 0.0
  %161 = vmatpush1.msra.mxu0 0.0
  %162 = vmatprep.subr.mxu0 0.0
  %163 = vmatpush1.msra.mxu0 0.0
  %164 = vmatprep.subr.mxu0 0.0
  %165 = vmatpush1.msra.mxu0 0.0
  %166 = vmatprep.subr.mxu0 0.0
  %167 = vmatpush1.msra.mxu0 0.0
  %168 = vmatprep.subr.mxu0 0.0
  %169 = vmatpush1.msra.mxu0 0.0
  %170 = vmatprep.subr.mxu0 0.0
  %171 = vmatpush1.msra.mxu0 0.0
  %172 = vmatprep.subr.mxu0 0.0
  %173 = vmatpush1.msra.mxu0 0.0
  %174 = vmatprep.subr.mxu0 0.0
  %175 = vmatpush1.msra.mxu0 0.0
  %176 = vmatprep.subr.mxu0 0.0
  %177 = vmatpush1.msra.mxu0 0.0
  %178 = vmatprep.subr.mxu0 0.0
  %179 = vmatpush1.msra.mxu0 0.0
  %180 = vmatprep.subr.mxu0 0.0
  %181 = vmatpush1.msra.mxu0 0.0
  %182 = vmatprep.subr.mxu0 0.0
  %183 = vmatpush1.msra.mxu0 0.0
  %184 = vmatprep.subr.mxu0 0.0
  %185 = vmatpush1.msra.mxu0 0.0
  %186 = vmatprep.subr.mxu0 0.0
  %187 = vmatpush1.msra.mxu0 0.0
  %188 = vmatprep.subr.mxu0 0.0
  %189 = vmatpush1.msra.mxu0 0.0
  %190 = vmatprep.subr.mxu0 0.0
  %191 = vmatpush1.msra.mxu0 0.0
  %192 = vmatprep.subr.mxu0 0.0
  %193 = vmatpush1.msra.mxu0 0.0
  %194 = vmatprep.subr.mxu0 0.0
  %195 = vmatpush1.msra.mxu0 0.0
  %196 = vmatprep.subr.mxu0 0.0
  %197 = vmatpush1.msra.mxu0 0.0
  %198 = vmatprep.subr.mxu0 0.0
  %199 = vmatpush1.msra.mxu0 0.0
  %200 = vmatprep.mubr.f32.mxu0 0.0
  %201 = vmatmul.mubr.f32.gmra.mrb[0].mxu0 %v131
  %v202 = vpop.f32.mrb[0].mxu0
  %v203 = vadd.f32 %v127, %v202
  %v204 = vpop.f32.mrb[0].mxu0
  %205 = vdwg.mxu0
  %206 = vadd.xlane.f32.xlu0 %v203
  %v207 = vpop.xlane.xlu0 %206
  %v208 = vmul.f32 %v207, 0.0078125
  %v209 = vmul.f32 %v203, %v203
  %210 = vadd.xlane.f32.xlu0 %v209
  %v211 = vpop.xlane.xlu0 %210
  %v212 = vmul.f32 %v211, 0.0078125
  %v213 = vmul.f32 %v208, %v208
  %v214 = vsub.f32 %v212, %v213
  %v215 = vmax.f32 %v214, 0.0
  %v216 = vld [vmem:[%s5] sm:$0xff]
  %v217 = vadd.f32 %v215, 1e-05
  %v218 = vrsqrt.pop %v217
  %v219 = vmul.f32 %v216, %v218
  %v220 = vld [vmem:[%s6] sm:$0xff]
  %v221 = vmul.f32 %v208, %v219
  %v222 = vsub.f32 %v220, %v221
  %224 = vset.pattern.permute.xlu0 0
  %225 = vperm.xlu0 %224, %v219
  %v226 = vpop.permute.xlu0 %225
  %v228 = vmul.f32 %v203, %v226
  %230 = vset.pattern.permute.xlu0 0
  %231 = vperm.xlu0 %230, %v222
  %v232 = vpop.permute.xlu0 %231
  %v234 = vadd.f32 %v228, %v232
  %v235 = vmax.f32 %v234, 0.0
  %237 = vrot.lane.b32.xlu0 %v235, 9
  %v238 = vpop.permute.xlu0 %237
  %v240 = vmul.f32 %v238, %v42
  %241 = vrot.lane.b32.xlu0 %v235, 8
  %v242 = vpop.permute.xlu0 %241
  %v244 = vmul.f32 %v242, %v50
  %245 = vrot.lane.b32.xlu0 %v235, 7
  %v246 = vpop.permute.xlu0 %245
  %v248 = vmul.f32 %v246, %v58
  %249 = vrot.lane.b32.xlu0 %v235, 1
  %v250 = vpop.permute.xlu0 %249
  %v252 = vmul.f32 %v250, %v66
  %v253 = vmul.f32 %v235, %v71
  %254 = vrot.lane.b32.xlu0 %v235, 127
  %v255 = vpop.permute.xlu0 %254
  %v257 = vmul.f32 %v255, %v79
  %258 = vrot.lane.b32.xlu0 %v235, 121
  %v259 = vpop.permute.xlu0 %258
  %v261 = vmul.f32 %v259, %v87
  %262 = vrot.lane.b32.xlu0 %v235, 120
  %v263 = vpop.permute.xlu0 %262
  %v265 = vmul.f32 %v263, %v95
  %266 = vrot.lane.b32.xlu0 %v235, 119
  %v267 = vpop.permute.xlu0 %266
  %v269 = vmul.f32 %v267, %v103
  %v270 = vld [vmem:[%s3] sm:$0xff]
  %vm271 = vcmask 588800
  %v273 = vsel %vm271, %v270, 0
  %275 = vmatprep.subr.mxu0 0.0
  %276 = vmatpush1.msra.mxu0 %v240
  %277 = vmatprep.subr.mxu0 0.0
  %278 = vmatpush1.msra.mxu0 %v244
  %279 = vmatprep.subr.mxu0 0.0
  %280 = vmatpush1.msra.mxu0 %v248
  %281 = vmatprep.subr.mxu0 0.0
  %282 = vmatpush1.msra.mxu0 %v252
  %283 = vmatprep.subr.mxu0 0.0
  %284 = vmatpush1.msra.mxu0 %v253
  %285 = vmatprep.subr.mxu0 0.0
  %286 = vmatpush1.msra.mxu0 %v257
  %287 = vmatprep.subr.mxu0 0.0
  %288 = vmatpush1.msra.mxu0 %v261
  %289 = vmatprep.subr.mxu0 0.0
  %290 = vmatpush1.msra.mxu0 %v265
  %291 = vmatprep.subr.mxu0 0.0
  %292 = vmatpush1.msra.mxu0 %v269
  %293 = vmatprep.subr.mxu0 0.0
  %294 = vmatpush1.msra.mxu0 0.0
  %295 = vmatprep.subr.mxu0 0.0
  %296 = vmatpush1.msra.mxu0 0.0
  %297 = vmatprep.subr.mxu0 0.0
  %298 = vmatpush1.msra.mxu0 0.0
  %299 = vmatprep.subr.mxu0 0.0
  %300 = vmatpush1.msra.mxu0 0.0
  %301 = vmatprep.subr.mxu0 0.0
  %302 = vmatpush1.msra.mxu0 0.0
  %303 = vmatprep.subr.mxu0 0.0
  %304 = vmatpush1.msra.mxu0 0.0
  %305 = vmatprep.subr.mxu0 0.0
  %306 = vmatpush1.msra.mxu0 0.0
  %307 = vmatprep.subr.mxu0 0.0
  %308 = vmatpush1.msra.mxu0 0.0
  %309 = vmatprep.subr.mxu0 0.0
  %310 = vmatpush1.msra.mxu0 0.0
  %311 = vmatprep.subr.mxu0 0.0
  %312 = vmatpush1.msra.mxu0 0.0
  %313 = vmatprep.subr.mxu0 0.0
  %314 = vmatpush1.msra.mxu0 0.0
  %315 = vmatprep.subr.mxu0 0.0
  %316 = vmatpush1.msra.mxu0 0.0
  %317 = vmatprep.subr.mxu0 0.0
  %318 = vmatpush1.msra.mxu0 0.0
  %319 = vmatprep.subr.mxu0 0.0
  %320 = vmatpush1.msra.mxu0 0.0
  %321 = vmatprep.subr.mxu0 0.0
  %322 = vmatpush1.msra.mxu0 0.0
  %323 = vmatprep.subr.mxu0 0.0
  %324 = vmatpush1.msra.mxu0 0.0
  %325 = vmatprep.subr.mxu0 0.0
  %326 = vmatpush1.msra.mxu0 0.0
  %327 = vmatprep.subr.mxu0 0.0
  %328 = vmatpush1.msra.mxu0 0.0
  %329 = vmatprep.subr.mxu0 0.0
  %330 = vmatpush1.msra.mxu0 0.0
  %331 = vmatprep.subr.mxu0 0.0
  %332 = vmatpush1.msra.mxu0 0.0
  %333 = vmatprep.subr.mxu0 0.0
  %334 = vmatpush1.msra.mxu0 0.0
  %335 = vmatprep.subr.mxu0 0.0
  %336 = vmatpush1.msra.mxu0 0.0
  %337 = vmatprep.subr.mxu0 0.0
  %338 = vmatpush1.msra.mxu0 0.0
  %339 = vmatprep.mubr.f32.mxu0 0.0
  %340 = vmatmul.mubr.f32.gmra.mrb[0].mxu0 %v273
  %v341 = vpop.f32.mrb[0].mxu0
  %v342 = vadd.f32 0.0, %v341
  %v343 = vpop.f32.mrb[0].mxu0
  %344 = vdwg.mxu0
  %345 = vadd.xlane.f32.xlu0 %v342
  %v346 = vpop.xlane.xlu0 %345
  %v347 = vmul.f32 %v346, 0.0078125
  %v348 = vmul.f32 %v342, %v342
  %349 = vadd.xlane.f32.xlu0 %v348
  %v350 = vpop.xlane.xlu0 %349
  %v351 = vmul.f32 %v350, 0.0078125
  %v352 = vmul.f32 %v347, %v347
  %v353 = vsub.f32 %v351, %v352
  %v354 = vmax.f32 %v353, 0.0
  %v355 = vld [vmem:[%s7] sm:$0xff]
  %v356 = vadd.f32 %v354, 1e-05
  %v357 = vrsqrt.pop %v356
  %v358 = vmul.f32 %v355, %v357
  %v359 = vld [vmem:[%s8] sm:$0xff]
  %v360 = vmul.f32 %v347, %v358
  %v361 = vsub.f32 %v359, %v360
  %363 = vset.pattern.permute.xlu0 0
  %364 = vperm.xlu0 %363, %v358
  %v365 = vpop.permute.xlu0 %364
  %v367 = vmul.f32 %v342, %v365
  %369 = vset.pattern.permute.xlu0 0
  %370 = vperm.xlu0 %369, %v361
  %v371 = vpop.permute.xlu0 %370
  %v373 = vadd.f32 %v367, %v371
  %v374 = vmax.f32 %v373, 0.0
  %v375 = vadd.f32 %v203, %v374
  %376 = vst [vmem:[%s9] sm:$0xff] %v375
  // Predicated region
  $region38: #{convblock_forward.1} parent=0 // pred_check
    _
  $region39: #{convblock_forward.1} parent=0 // pred_check_branch
    %378 = sbr.rel (0) target = $region41
  $region40: #{convblock_forward.1} parent=0 // pred_region
    _
  $region41: #{convblock_forward.1} parent=0 // pred_fallthru
    _
  // Predicated region
  $region42: #{convblock_forward.1} parent=0 // pred_check
    _
  $region43: #{convblock_forward.1} parent=0 // pred_check_branch
    %380 = sbr.rel (0) target = $region45
  $region44: #{convblock_forward.1} parent=0 // pred_region
    _
  $region45: #{convblock_forward.1} parent=0 // pred_fallthru
    _

</llo_original>
